<compile_context>
chip_gen: v7x
topology: tpu7x:2x2x1
jax: 0.10.0
libtpu: 0.0.40
codegen_flags: <defaults>
</compile_context>

<pallas_src>
import functools

import jax
import jax.numpy as jnp
from jax.experimental import pallas as pl
from jax.experimental.pallas import tpu as pltpu


def _round_up(n, m):
    return ((n + m - 1) // m) * m


def _rnn_kernel(x_ref, wx_ref, wh_ref, b1_ref, wd_ref, bd_ref, out_ref,
                xproj_ref, hs_ref, *, T, B):
    """Whole-sequence RNN forward in a single kernel invocation.

    x_ref:   (T*B, F)   time-major flattened input
    wx_ref:  (F, H)     input -> hidden weights
    wh_ref:  (H, H)     hidden -> hidden weights
    b1_ref:  (1, H)     one_step bias
    wd_ref:  (H, Opad)  decode weights (zero-padded to lane-dense Opad)
    bd_ref:  (1, Opad)  decode bias (zero-padded)
    out_ref: (T*B, Opad)
    xproj_ref, hs_ref: (T*B, H) float32 VMEM scratch
    """
    H = wh_ref.shape[0]

    # Hoisted, time-parallel input projection: one batched matmul + bias.
    xproj_ref[...] = (
        jnp.dot(x_ref[...], wx_ref[...], preferred_element_type=jnp.float32)
        + b1_ref[...]
    )

    wh = wh_ref[...]
    h = jnp.zeros((B, H), jnp.float32)           # hidden state lives in vregs

    # Serial recurrence: only a (B,H)x(H,H) GEMM + tanh per step.
    for t in range(T):                           # static unroll (T is small)
        pre = xproj_ref[t * B:(t + 1) * B, :] + jnp.dot(
            h, wh, preferred_element_type=jnp.float32)
        h = jnp.tanh(pre)
        hs_ref[t * B:(t + 1) * B, :] = h

    # Hoisted, time-parallel decode: one lane-dense matmul + single writeback.
    y = (jnp.dot(hs_ref[...], wd_ref[...], preferred_element_type=jnp.float32)
         + bd_ref[...])
    out_ref[...] = y.astype(out_ref.dtype)


def rnn_forward(x, wx, wh, b1, wd, bd):
    """x: (B, T, F) float32 -> (B, T, O) float32."""
    B, T, F = x.shape
    H = wh.shape[0]
    O = wd.shape[1]
    O_pad = _round_up(O, 128)                    # lane-dense output slab

    # Time-major flatten so each timestep owns a contiguous row block.
    x_tm = jnp.transpose(x, (1, 0, 2)).reshape(T * B, F)

    # Zero-pad the decode weights/bias so the kernel output is lane-dense.
    wd_p = jnp.zeros((H, O_pad), wd.dtype).at[:, :O].set(wd)
    bd_p = jnp.zeros((1, O_pad), bd.dtype).at[:, :O].set(bd)

    full2 = lambda i: (0, 0)

    out_flat = pl.pallas_call(
        functools.partial(_rnn_kernel, T=T, B=B),
        out_shape=jax.ShapeDtypeStruct((T * B, O_pad), jnp.float32),
        grid_spec=pltpu.PrefetchScalarGridSpec(
            num_scalar_prefetch=0,
            grid=(1,),
            in_specs=[
                pl.BlockSpec((T * B, F), full2),     # x (time-major, flat)
                pl.BlockSpec((F, H), full2),         # Wx
                pl.BlockSpec((H, H), full2),         # Wh
                pl.BlockSpec((1, H), full2),         # b1
                pl.BlockSpec((H, O_pad), full2),     # Wd (padded)
                pl.BlockSpec((1, O_pad), full2),     # bd (padded)
            ],
            out_specs=pl.BlockSpec((T * B, O_pad), full2),
            scratch_shapes=[
                pltpu.VMEM((T * B, H), jnp.float32),  # xproj
                pltpu.VMEM((T * B, H), jnp.float32),  # hidden-state history
            ],
        ),
        compiler_params=pltpu.CompilerParams(
            dimension_semantics=("arbitrary",),
        ),
    )(x_tm, wx, wh, b1, wd_p, bd_p)

    out_tm = out_flat[:, :O].reshape(T, B, O)
    return jnp.transpose(out_tm, (1, 0, 2))      # back to (B, T, O)


def rnn_forward_ref(x, wx, wh, b1, wd, bd):
    """Pure-JAX reference mirroring the PyTorch loop."""
    B, T, F = x.shape
    H = wh.shape[0]
    h = jnp.zeros((B, H), jnp.float32)
    outs = []
    for t in range(T):
        h = jnp.tanh(x[:, t, :] @ wx + h @ wh + b1)
        outs.append(h @ wd + bd)
    return jnp.stack(outs, axis=1)


if __name__ == "__main__":
    # Small shapes: classification mode -> per-step input features = 2.
    B, T, F, H, O = 4, 8, 2, 32, 10

    key = jax.random.PRNGKey(0)
    kx, k1, k2, k3, k4 = jax.random.split(key, 5)

    x = jax.random.normal(kx, (B, T, F), dtype=jnp.float32)

    # nn.Linear(H + 2, H): weight (H, H+2), bias (H); uniform(-1/sqrt(fan_in), ..)
    bound1 = 1.0 / jnp.sqrt(H + F)
    w_one_step = jax.random.uniform(k1, (H, H + F), jnp.float32, -bound1, bound1)
    b_one_step = jax.random.uniform(k2, (H,), jnp.float32, -bound1, bound1)
    wx = jnp.transpose(w_one_step[:, :F])        # (F, H)
    wh = jnp.transpose(w_one_step[:, F:])        # (H, H)
    b1 = b_one_step.reshape(1, H)

    # nn.Linear(H, O)
    bound2 = 1.0 / jnp.sqrt(H)
    w_dec = jax.random.uniform(k3, (O, H), jnp.float32, -bound2, bound2)
    b_dec = jax.random.uniform(k4, (O,), jnp.float32, -bound2, bound2)
    wd = jnp.transpose(w_dec)                    # (H, O)
    bd = b_dec.reshape(1, O)

    out = jax.block_until_ready(rnn_forward(x, wx, wh, b1, wd, bd))

    ref = rnn_forward_ref(x, wx, wh, b1, wd, bd)
    assert out.shape == (B, T, O)
    assert jnp.allclose(out, ref, atol=1e-5, rtol=1e-5)

    print("KERNEL_OK")
</pallas_src>

<mosaic_0001>
module attributes {stable_mosaic.version = 11 : i64} {
  func.func @_rnn_kernel(%arg0: i32, %arg1: memref<32x2xf32, #tpu.memory_space<vmem>>, %arg2: memref<2x32xf32, #tpu.memory_space<vmem>>, %arg3: memref<32x32xf32, #tpu.memory_space<vmem>>, %arg4: memref<1x32xf32, #tpu.memory_space<vmem>>, %arg5: memref<32x128xf32, #tpu.memory_space<vmem>>, %arg6: memref<1x128xf32, #tpu.memory_space<vmem>>, %arg7: memref<32x128xf32, #tpu.memory_space<vmem>>, %arg8: memref<32x32xf32, #tpu.memory_space<vmem>>, %arg9: memref<32x32xf32, #tpu.memory_space<vmem>>) attributes {dimension_semantics = [#tpu.dimension_semantics<arbitrary>], iteration_bounds = array<i64: 1>, scalar_prefetch = 0 : i64, scratch_operands = 2 : i64, tpu.core_type = #tpu.core_type<tc>, window_params = [{pipeline_mode = #tpu.pipeline_mode<synchronous>, transform_indices = @transform_0, window_bounds = array<i64: 32, 2>}, {pipeline_mode = #tpu.pipeline_mode<synchronous>, transform_indices = @transform_1, window_bounds = array<i64: 2, 32>}, {pipeline_mode = #tpu.pipeline_mode<synchronous>, transform_indices = @transform_2, window_bounds = array<i64: 32, 32>}, {pipeline_mode = #tpu.pipeline_mode<synchronous>, transform_indices = @transform_3, window_bounds = array<i64: 1, 32>}, {pipeline_mode = #tpu.pipeline_mode<synchronous>, transform_indices = @transform_4, window_bounds = array<i64: 32, 128>}, {pipeline_mode = #tpu.pipeline_mode<synchronous>, transform_indices = @transform_5, window_bounds = array<i64: 1, 128>}, {pipeline_mode = #tpu.pipeline_mode<synchronous>, transform_indices = @transform_6, window_bounds = array<i64: 32, 128>}]} {
    %c0 = arith.constant 0 : index
    %c0_0 = arith.constant 0 : index
    %0 = vector.load %arg1[%c0, %c0_0] : memref<32x2xf32, #tpu.memory_space<vmem>>, vector<32x2xf32>
    %c0_1 = arith.constant 0 : index
    %c0_2 = arith.constant 0 : index
    %1 = vector.load %arg2[%c0_1, %c0_2] : memref<2x32xf32, #tpu.memory_space<vmem>>, vector<2x32xf32>
    %cst = arith.constant dense<0.000000e+00> : vector<32x32xf32>
    %2 = tpu.matmul %0, %1, %cst {dimension_numbers = #tpu.dot_dimension_numbers<[1], [0], [0], [1], [0, 0, 1, 1], [], []>} : vector<32x2xf32>, vector<2x32xf32>, vector<32x32xf32> -> vector<32x32xf32>
    %c0_3 = arith.constant 0 : index
    %c0_4 = arith.constant 0 : index
    %3 = vector.load %arg4[%c0_3, %c0_4] : memref<1x32xf32, #tpu.memory_space<vmem>>, vector<1x32xf32>
    %4 = vector.broadcast %3 : vector<1x32xf32> to vector<32x32xf32>
    %5 = arith.addf %2, %4 : vector<32x32xf32>
    %c0_5 = arith.constant 0 : index
    %c0_6 = arith.constant 0 : index
    %6 = vector.load %arg8[%c0_5, %c0_6] : memref<32x32xf32, #tpu.memory_space<vmem>>, vector<32x32xf32>
    tpu.vector_store %arg8[%c0_5, %c0_6], %5 {strides = array<i32>} : memref<32x32xf32, #tpu.memory_space<vmem>>, vector<32x32xf32>,
    %c0_7 = arith.constant 0 : index
    %c0_8 = arith.constant 0 : index
    %7 = vector.load %arg3[%c0_7, %c0_8] : memref<32x32xf32, #tpu.memory_space<vmem>>, vector<32x32xf32>
    %cst_9 = arith.constant 0.000000e+00 : f32
    %8 = vector.broadcast %cst_9 : f32 to vector<4x32xf32>
    %c0_10 = arith.constant 0 : index
    %c0_11 = arith.constant 0 : index
    %9 = vector.load %arg8[%c0_10, %c0_11] : memref<32x32xf32, #tpu.memory_space<vmem>>, vector<4x32xf32>
    %cst_12 = arith.constant dense<0.000000e+00> : vector<4x32xf32>
    %10 = tpu.matmul %8, %7, %cst_12 {dimension_numbers = #tpu.dot_dimension_numbers<[1], [0], [0], [1], [0, 0, 1, 1], [], []>} : vector<4x32xf32>, vector<32x32xf32>, vector<4x32xf32> -> vector<4x32xf32>
    %11 = arith.addf %9, %10 : vector<4x32xf32>
    %12 = math.tanh %11 : vector<4x32xf32>
    %c0_13 = arith.constant 0 : index
    %c0_14 = arith.constant 0 : index
    %13 = vector.load %arg9[%c0_13, %c0_14] : memref<32x32xf32, #tpu.memory_space<vmem>>, vector<4x32xf32>
    tpu.vector_store %arg9[%c0_13, %c0_14], %12 {strides = array<i32>} : memref<32x32xf32, #tpu.memory_space<vmem>>, vector<4x32xf32>,
    %c4 = arith.constant 4 : index
    %c0_15 = arith.constant 0 : index
    %14 = vector.load %arg8[%c4, %c0_15] : memref<32x32xf32, #tpu.memory_space<vmem>>, vector<4x32xf32>
    %cst_16 = arith.constant dense<0.000000e+00> : vector<4x32xf32>
    %15 = tpu.matmul %12, %7, %cst_16 {dimension_numbers = #tpu.dot_dimension_numbers<[1], [0], [0], [1], [0, 0, 1, 1], [], []>} : vector<4x32xf32>, vector<32x32xf32>, vector<4x32xf32> -> vector<4x32xf32>
    %16 = arith.addf %14, %15 : vector<4x32xf32>
    %17 = math.tanh %16 : vector<4x32xf32>
    %c4_17 = arith.constant 4 : index
    %c0_18 = arith.constant 0 : index
    %18 = vector.load %arg9[%c4_17, %c0_18] : memref<32x32xf32, #tpu.memory_space<vmem>>, vector<4x32xf32>
    tpu.vector_store %arg9[%c4_17, %c0_18], %17 {strides = array<i32>} : memref<32x32xf32, #tpu.memory_space<vmem>>, vector<4x32xf32>,
    %c8 = arith.constant 8 : index
    %c0_19 = arith.constant 0 : index
    %19 = vector.load %arg8[%c8, %c0_19] : memref<32x32xf32, #tpu.memory_space<vmem>>, vector<4x32xf32>
    %cst_20 = arith.constant dense<0.000000e+00> : vector<4x32xf32>
    %20 = tpu.matmul %17, %7, %cst_20 {dimension_numbers = #tpu.dot_dimension_numbers<[1], [0], [0], [1], [0, 0, 1, 1], [], []>} : vector<4x32xf32>, vector<32x32xf32>, vector<4x32xf32> -> vector<4x32xf32>
    %21 = arith.addf %19, %20 : vector<4x32xf32>
    %22 = math.tanh %21 : vector<4x32xf32>
    %c8_21 = arith.constant 8 : index
    %c0_22 = arith.constant 0 : index
    %23 = vector.load %arg9[%c8_21, %c0_22] : memref<32x32xf32, #tpu.memory_space<vmem>>, vector<4x32xf32>
    tpu.vector_store %arg9[%c8_21, %c0_22], %22 {strides = array<i32>} : memref<32x32xf32, #tpu.memory_space<vmem>>, vector<4x32xf32>,
    %c12 = arith.constant 12 : index
    %c0_23 = arith.constant 0 : index
    %24 = vector.load %arg8[%c12, %c0_23] : memref<32x32xf32, #tpu.memory_space<vmem>>, vector<4x32xf32>
    %cst_24 = arith.constant dense<0.000000e+00> : vector<4x32xf32>
    %25 = tpu.matmul %22, %7, %cst_24 {dimension_numbers = #tpu.dot_dimension_numbers<[1], [0], [0], [1], [0, 0, 1, 1], [], []>} : vector<4x32xf32>, vector<32x32xf32>, vector<4x32xf32> -> vector<4x32xf32>
    %26 = arith.addf %24, %25 : vector<4x32xf32>
    %27 = math.tanh %26 : vector<4x32xf32>
    %c12_25 = arith.constant 12 : index
    %c0_26 = arith.constant 0 : index
    %28 = vector.load %arg9[%c12_25, %c0_26] : memref<32x32xf32, #tpu.memory_space<vmem>>, vector<4x32xf32>
    tpu.vector_store %arg9[%c12_25, %c0_26], %27 {strides = array<i32>} : memref<32x32xf32, #tpu.memory_space<vmem>>, vector<4x32xf32>,
    %c16 = arith.constant 16 : index
    %c0_27 = arith.constant 0 : index
    %29 = vector.load %arg8[%c16, %c0_27] : memref<32x32xf32, #tpu.memory_space<vmem>>, vector<4x32xf32>
    %cst_28 = arith.constant dense<0.000000e+00> : vector<4x32xf32>
    %30 = tpu.matmul %27, %7, %cst_28 {dimension_numbers = #tpu.dot_dimension_numbers<[1], [0], [0], [1], [0, 0, 1, 1], [], []>} : vector<4x32xf32>, vector<32x32xf32>, vector<4x32xf32> -> vector<4x32xf32>
    %31 = arith.addf %29, %30 : vector<4x32xf32>
    %32 = math.tanh %31 : vector<4x32xf32>
    %c16_29 = arith.constant 16 : index
    %c0_30 = arith.constant 0 : index
    %33 = vector.load %arg9[%c16_29, %c0_30] : memref<32x32xf32, #tpu.memory_space<vmem>>, vector<4x32xf32>
    tpu.vector_store %arg9[%c16_29, %c0_30], %32 {strides = array<i32>} : memref<32x32xf32, #tpu.memory_space<vmem>>, vector<4x32xf32>,
    %c20 = arith.constant 20 : index
    %c0_31 = arith.constant 0 : index
    %34 = vector.load %arg8[%c20, %c0_31] : memref<32x32xf32, #tpu.memory_space<vmem>>, vector<4x32xf32>
    %cst_32 = arith.constant dense<0.000000e+00> : vector<4x32xf32>
    %35 = tpu.matmul %32, %7, %cst_32 {dimension_numbers = #tpu.dot_dimension_numbers<[1], [0], [0], [1], [0, 0, 1, 1], [], []>} : vector<4x32xf32>, vector<32x32xf32>, vector<4x32xf32> -> vector<4x32xf32>
    %36 = arith.addf %34, %35 : vector<4x32xf32>
    %37 = math.tanh %36 : vector<4x32xf32>
    %c20_33 = arith.constant 20 : index
    %c0_34 = arith.constant 0 : index
    %38 = vector.load %arg9[%c20_33, %c0_34] : memref<32x32xf32, #tpu.memory_space<vmem>>, vector<4x32xf32>
    tpu.vector_store %arg9[%c20_33, %c0_34], %37 {strides = array<i32>} : memref<32x32xf32, #tpu.memory_space<vmem>>, vector<4x32xf32>,
    %c24 = arith.constant 24 : index
    %c0_35 = arith.constant 0 : index
    %39 = vector.load %arg8[%c24, %c0_35] : memref<32x32xf32, #tpu.memory_space<vmem>>, vector<4x32xf32>
    %cst_36 = arith.constant dense<0.000000e+00> : vector<4x32xf32>
    %40 = tpu.matmul %37, %7, %cst_36 {dimension_numbers = #tpu.dot_dimension_numbers<[1], [0], [0], [1], [0, 0, 1, 1], [], []>} : vector<4x32xf32>, vector<32x32xf32>, vector<4x32xf32> -> vector<4x32xf32>
    %41 = arith.addf %39, %40 : vector<4x32xf32>
    %42 = math.tanh %41 : vector<4x32xf32>
    %c24_37 = arith.constant 24 : index
    %c0_38 = arith.constant 0 : index
    %43 = vector.load %arg9[%c24_37, %c0_38] : memref<32x32xf32, #tpu.memory_space<vmem>>, vector<4x32xf32>
    tpu.vector_store %arg9[%c24_37, %c0_38], %42 {strides = array<i32>} : memref<32x32xf32, #tpu.memory_space<vmem>>, vector<4x32xf32>,
    %c28 = arith.constant 28 : index
    %c0_39 = arith.constant 0 : index
    %44 = vector.load %arg8[%c28, %c0_39] : memref<32x32xf32, #tpu.memory_space<vmem>>, vector<4x32xf32>
    %cst_40 = arith.constant dense<0.000000e+00> : vector<4x32xf32>
    %45 = tpu.matmul %42, %7, %cst_40 {dimension_numbers = #tpu.dot_dimension_numbers<[1], [0], [0], [1], [0, 0, 1, 1], [], []>} : vector<4x32xf32>, vector<32x32xf32>, vector<4x32xf32> -> vector<4x32xf32>
    %46 = arith.addf %44, %45 : vector<4x32xf32>
    %47 = math.tanh %46 : vector<4x32xf32>
    %c28_41 = arith.constant 28 : index
    %c0_42 = arith.constant 0 : index
    %48 = vector.load %arg9[%c28_41, %c0_42] : memref<32x32xf32, #tpu.memory_space<vmem>>, vector<4x32xf32>
    tpu.vector_store %arg9[%c28_41, %c0_42], %47 {strides = array<i32>} : memref<32x32xf32, #tpu.memory_space<vmem>>, vector<4x32xf32>,
    %c0_43 = arith.constant 0 : index
    %c0_44 = arith.constant 0 : index
    %49 = vector.load %arg9[%c0_43, %c0_44] : memref<32x32xf32, #tpu.memory_space<vmem>>, vector<32x32xf32>
    %c0_45 = arith.constant 0 : index
    %c0_46 = arith.constant 0 : index
    %50 = vector.load %arg5[%c0_45, %c0_46] : memref<32x128xf32, #tpu.memory_space<vmem>>, vector<32x128xf32>
    %cst_47 = arith.constant dense<0.000000e+00> : vector<32x128xf32>
    %51 = tpu.matmul %49, %50, %cst_47 {dimension_numbers = #tpu.dot_dimension_numbers<[1], [0], [0], [1], [0, 0, 1, 1], [], []>} : vector<32x32xf32>, vector<32x128xf32>, vector<32x128xf32> -> vector<32x128xf32>
    %c0_48 = arith.constant 0 : index
    %c0_49 = arith.constant 0 : index
    %52 = vector.load %arg6[%c0_48, %c0_49] : memref<1x128xf32, #tpu.memory_space<vmem>>, vector<1x128xf32>
    %53 = vector.broadcast %52 : vector<1x128xf32> to vector<32x128xf32>
    %54 = arith.addf %51, %53 : vector<32x128xf32>
    %c0_50 = arith.constant 0 : index
    %c0_51 = arith.constant 0 : index
    %55 = vector.load %arg7[%c0_50, %c0_51] : memref<32x128xf32, #tpu.memory_space<vmem>>, vector<32x128xf32>
    tpu.vector_store %arg7[%c0_50, %c0_51], %54 {strides = array<i32>} : memref<32x128xf32, #tpu.memory_space<vmem>>, vector<32x128xf32>,
    return
  }
  func.func @transform_0(%arg0: i32) -> (i32, i32) {
    %c0_i32 = arith.constant 0 : i32
    %c0_i32_0 = arith.constant 0 : i32
    %c0_i32_1 = arith.constant 0 : i32
    return %c0_i32, %c0_i32_0 : i32, i32
  }
  func.func @transform_1(%arg0: i32) -> (i32, i32) {
    %c0_i32 = arith.constant 0 : i32
    %c0_i32_0 = arith.constant 0 : i32
    %c0_i32_1 = arith.constant 0 : i32
    return %c0_i32, %c0_i32_0 : i32, i32
  }
  func.func @transform_2(%arg0: i32) -> (i32, i32) {
    %c0_i32 = arith.constant 0 : i32
    %c0_i32_0 = arith.constant 0 : i32
    %c0_i32_1 = arith.constant 0 : i32
    return %c0_i32, %c0_i32_0 : i32, i32
  }
  func.func @transform_3(%arg0: i32) -> (i32, i32) {
    %c0_i32 = arith.constant 0 : i32
    %c0_i32_0 = arith.constant 0 : i32
    %c0_i32_1 = arith.constant 0 : i32
    return %c0_i32, %c0_i32_0 : i32, i32
  }
  func.func @transform_4(%arg0: i32) -> (i32, i32) {
    %c0_i32 = arith.constant 0 : i32
    %c0_i32_0 = arith.constant 0 : i32
    %c0_i32_1 = arith.constant 0 : i32
    return %c0_i32, %c0_i32_0 : i32, i32
  }
  func.func @transform_5(%arg0: i32) -> (i32, i32) {
    %c0_i32 = arith.constant 0 : i32
    %c0_i32_0 = arith.constant 0 : i32
    %c0_i32_1 = arith.constant 0 : i32
    return %c0_i32, %c0_i32_0 : i32, i32
  }
  func.func @transform_6(%arg0: i32) -> (i32, i32) {
    %c0_i32 = arith.constant 0 : i32
    %c0_i32_0 = arith.constant 0 : i32
    %c0_i32_1 = arith.constant 0 : i32
    return %c0_i32, %c0_i32_0 : i32, i32
  }
}

</mosaic_0001>

<llo_original>
// kernel: tpu_custom_call.1
$region0: #{tpu_custom_call.1}
  #allocation0 [shape = 'u32[]', space=smem, size = 0x4, offset = 0x4, fixed_abs, tag = 'smem constant byte address 0x4 - core index']
  #allocation1 [shape = 'u32[144,128]{1,0:T(1,128)}', space=vmem, size = 0x12000, scoped, tag = 'internal scratch']
  #allocation2 [shape = 'f32[32,32]{1,0:T(8,128)}', space=vmem, size = 0x4000, scoped, tag = 'scratch operand']
  #allocation3 [shape = 'f32[32,32]{1,0:T(8,128)}', space=vmem, size = 0x4000, scoped, tag = 'scratch operand']
  %s0 = inlined_call_operand.vmem [shape: f32[32,2], index: 0, kind: input, shape index: {}]
  %s1 = inlined_call_operand.vmem [shape: f32[2,32], index: 1, kind: input, shape index: {}]
  %s2 = inlined_call_operand.vmem [shape: f32[32,32], index: 2, kind: input, shape index: {}]
  %s3 = inlined_call_operand.vmem [shape: f32[1,32], index: 3, kind: input, shape index: {}]
  %s4 = inlined_call_operand.hbm [shape: f32[32,128], index: 4, kind: input, shape index: {}]
  %s5 = inlined_call_operand.vmem [shape: f32[1,128], index: 5, kind: input, shape index: {}]
  %s6 = inlined_call_operand.hbm [shape: f32[32,128], index: 6, kind: output, shape index: {}]
  %s7 = sld [smem:[#allocation0]]
  $region38: #{tpu_custom_call.1} parent=0
    _
  %s9 = ssub.s32 1, %s7
  %s10 = scalar_select 0, %s9, %s7
  $region1: #{tpu_custom_call.1} parent=0
    #allocation4 [shape = 'u8[16384]{0}', space=vmem, size = 0x4000, scoped, tag = 'input window, operand 4, single buffered']
    #allocation5 [shape = 's32[1]{0}', space=sflag, size = 0x4, scoped, tag = 'scoped memory for tpu_custom_call.1']
    #allocation6 [shape = 's32[1]{0}', space=sflag, size = 0x4, scoped, tag = 'scoped memory for tpu_custom_call.1']
    #allocation7 [shape = 'u8[16384]{0}', space=vmem, size = 0x4000, scoped, tag = 'output window, operand 0, single buffered']
    %11 = vsyncpa [#allocation5], 0
    %12 = vsyncpa [#allocation6], 0
    // Predicated region
    $region2: #{tpu_custom_call.1} parent=1 // pred_check
      _
    $region3: #{tpu_custom_call.1} parent=1 // pred_check_branch
      %14 = sbr.rel (0) target = $region5
    $region4: #{tpu_custom_call.1} parent=1 // pred_region
      _
    $region5: #{tpu_custom_call.1} parent=1 // pred_fallthru
      _
    // Predicated region
    $region6: #{tpu_custom_call.1} parent=1 // pred_check
      _
    $region7: #{tpu_custom_call.1} parent=1 // pred_check_branch
      %16 = sbr.rel (0) target = $region9
    $region8: #{tpu_custom_call.1} parent=1 // pred_region
      _
    $region9: #{tpu_custom_call.1} parent=1 // pred_fallthru
      _
    // Predicated region
    $region10: #{tpu_custom_call.1} parent=1 // pred_check
      _
    $region11: #{tpu_custom_call.1} parent=1 // pred_check_branch
      %18 = sbr.rel (0) target = $region13
    $region12: #{tpu_custom_call.1} parent=1 // pred_region
      _
    $region13: #{tpu_custom_call.1} parent=1 // pred_fallthru
      _
    // Predicated region
    $region14: #{tpu_custom_call.1} parent=1 // pred_check
      _
    $region15: #{tpu_custom_call.1} parent=1 // pred_check_branch
      %20 = sbr.rel (0) target = $region17
    $region16: #{tpu_custom_call.1} parent=1 // pred_region
      _
    $region17: #{tpu_custom_call.1} parent=1 // pred_fallthru
      _
    // Predicated region
    $region18: #{tpu_custom_call.1} parent=1 // pred_check
      _
    $region19: #{tpu_custom_call.1} parent=1 // pred_check_branch
      %22 = sbr.rel (0) target = $region21
    $region20: #{tpu_custom_call.1} parent=1 // pred_region
      %s24 = ssub.s32 512, 512
      %25 = vsyncadd [#allocation5], %s24
      %s26 = sshll.u32 [#allocation4], 4
      %s27 = int_to_ptr.vmem [resolvable:$true] %s26
      %32 = dma.hbm_to_vmem [thread:$0]  %s4, 512, %s27, [#allocation5], 128, 128, 8
    $region21: #{tpu_custom_call.1} parent=1 // pred_fallthru
      _
    // Predicated region
    $region22: #{tpu_custom_call.1} parent=1 // pred_check
      _
    $region23: #{tpu_custom_call.1} parent=1 // pred_check_branch
      %34 = sbr.rel (0) target = $region25
    $region24: #{tpu_custom_call.1} parent=1 // pred_region
      _
    $region25: #{tpu_custom_call.1} parent=1 // pred_fallthru
      _
    // Predicated region
    $region26: #{tpu_custom_call.1} parent=1 // pred_check
      _
    $region27: #{tpu_custom_call.1} parent=1 // pred_check_branch
      %36 = sbr.rel (0) target = $region29
    $region28: #{tpu_custom_call.1} parent=1 // pred_region
      %37 = dma.done [#allocation5], 512
    $region29: #{tpu_custom_call.1} parent=1 // pred_fallthru
      _
    %v38 = vld [vmem:[%s0] sm:$0xff]
    %v39 = vld [vmem:[%s0 + $0x8] sm:$0xff]
    %v40 = vld [vmem:[%s0 + $0x10] sm:$0xff]
    %v41 = vld [vmem:[%s0 + $0x18] sm:$0xff]
    %v42 = vld [vmem:[%s1] sm:$0x3]
    %v43 = vld [vmem:[%s3] sm:$0x1]
    %v45 = vlaneseq
    %v46 = vshrl.u32 %v45, 7
    %v47 = vsub.s32 0, %v46
    %v48 = vrot.slane %v43, %v47
    %vm50 = vcmask 15360
    %v52 = vsel %vm50, %v38, 0
    %v55 = vsel %vm50, %v39, 0
    %v58 = vsel %vm50, %v40, 0
    %v61 = vsel %vm50, %v41, 0
    %vm63 = vcmask 1041408
    %v65 = vsel %vm63, %v42, 0
    %67 = vmatprep.subr.mxu0 0.0
    %68 = vmatpush1.msra.mxu0 %v65
    %69 = vmatprep.subr.mxu0 0.0
    %70 = vmatpush1.msra.mxu0 0.0
    %71 = vmatprep.subr.mxu0 0.0
    %72 = vmatpush1.msra.mxu0 0.0
    %73 = vmatprep.subr.mxu0 0.0
    %74 = vmatpush1.msra.mxu0 0.0
    %75 = vmatprep.subr.mxu0 0.0
    %76 = vmatpush1.msra.mxu0 0.0
    %77 = vmatprep.subr.mxu0 0.0
    %78 = vmatpush1.msra.mxu0 0.0
    %79 = vmatprep.subr.mxu0 0.0
    %80 = vmatpush1.msra.mxu0 0.0
    %81 = vmatprep.subr.mxu0 0.0
    %82 = vmatpush1.msra.mxu0 0.0
    %83 = vmatprep.subr.mxu0 0.0
    %84 = vmatpush1.msra.mxu0 0.0
    %85 = vmatprep.subr.mxu0 0.0
    %86 = vmatpush1.msra.mxu0 0.0
    %87 = vmatprep.subr.mxu0 0.0
    %88 = vmatpush1.msra.mxu0 0.0
    %89 = vmatprep.subr.mxu0 0.0
    %90 = vmatpush1.msra.mxu0 0.0
    %91 = vmatprep.subr.mxu0 0.0
    %92 = vmatpush1.msra.mxu0 0.0
    %93 = vmatprep.subr.mxu0 0.0
    %94 = vmatpush1.msra.mxu0 0.0
    %95 = vmatprep.subr.mxu0 0.0
    %96 = vmatpush1.msra.mxu0 0.0
    %97 = vmatprep.subr.mxu0 0.0
    %98 = vmatpush1.msra.mxu0 0.0
    %99 = vmatprep.subr.mxu0 0.0
    %100 = vmatpush1.msra.mxu0 0.0
    %101 = vmatprep.subr.mxu0 0.0
    %102 = vmatpush1.msra.mxu0 0.0
    %103 = vmatprep.subr.mxu0 0.0
    %104 = vmatpush1.msra.mxu0 0.0
    %105 = vmatprep.subr.mxu0 0.0
    %106 = vmatpush1.msra.mxu0 0.0
    %107 = vmatprep.subr.mxu0 0.0
    %108 = vmatpush1.msra.mxu0 0.0
    %109 = vmatprep.subr.mxu0 0.0
    %110 = vmatpush1.msra.mxu0 0.0
    %111 = vmatprep.subr.mxu0 0.0
    %112 = vmatpush1.msra.mxu0 0.0
    %113 = vmatprep.subr.mxu0 0.0
    %114 = vmatpush1.msra.mxu0 0.0
    %115 = vmatprep.subr.mxu0 0.0
    %116 = vmatpush1.msra.mxu0 0.0
    %117 = vmatprep.subr.mxu0 0.0
    %118 = vmatpush1.msra.mxu0 0.0
    %119 = vmatprep.subr.mxu0 0.0
    %120 = vmatpush1.msra.mxu0 0.0
    %121 = vmatprep.subr.mxu0 0.0
    %122 = vmatpush1.msra.mxu0 0.0
    %123 = vmatprep.subr.mxu0 0.0
    %124 = vmatpush1.msra.mxu0 0.0
    %125 = vmatprep.subr.mxu0 0.0
    %126 = vmatpush1.msra.mxu0 0.0
    %127 = vmatprep.subr.mxu0 0.0
    %128 = vmatpush1.msra.mxu0 0.0
    %129 = vmatprep.subr.mxu0 0.0
    %130 = vmatpush1.msra.mxu0 0.0
    %131 = vmatprep.mubr.f32.mxu0 0.0
    %132 = vmatmul.mubr.f32.gmra.mrb[0].mxu0 %v52
    %v133 = vpop.f32.mrb[0].mxu0
    %v134 = vadd.f32 %v48, %v133
    %v135 = vpop.f32.mrb[0].mxu0
    %136 = vmatprep.mubr.f32.mxu0 0.0
    %137 = vmatmul.mubr.f32.gmra.mrb[0].mxu0 %v55
    %v138 = vpop.f32.mrb[0].mxu0
    %v139 = vadd.f32 %v48, %v138
    %v140 = vpop.f32.mrb[0].mxu0
    %141 = vmatprep.mubr.f32.mxu0 0.0
    %142 = vmatmul.mubr.f32.gmra.mrb[0].mxu0 %v58
    %v143 = vpop.f32.mrb[0].mxu0
    %v144 = vadd.f32 %v48, %v143
    %v145 = vpop.f32.mrb[0].mxu0
    %146 = vmatprep.mubr.f32.mxu0 0.0
    %147 = vmatmul.mubr.f32.gmra.mrb[0].mxu0 %v61
    %v148 = vpop.f32.mrb[0].mxu0
    %v149 = vadd.f32 %v48, %v148
    %v150 = vpop.f32.mrb[0].mxu0
    %151 = vdwg.mxu0
    %vm152 = vcmask 261120
    %153 = vst.msk [vmem:[#allocation2] sm:$0xff] %vm152, %v134
    %154 = vst.msk [vmem:[#allocation2 + $0x8] sm:$0xff] %vm152, %v139
    %155 = vst.msk [vmem:[#allocation2 + $0x10] sm:$0xff] %vm152, %v144
    %156 = vst.msk [vmem:[#allocation2 + $0x18] sm:$0xff] %vm152, %v149
    %v157 = vld [vmem:[%s2] sm:$0xff]
    %v158 = vld [vmem:[%s2 + $0x8] sm:$0xff]
    %v159 = vld [vmem:[%s2 + $0x10] sm:$0xff]
    %v160 = vld [vmem:[%s2 + $0x18] sm:$0xff]
    %v161 = vld [vmem:[#allocation2] sm:$0xf]
    %v163 = vsel %vm152, 0.0, 0
    %165 = vmatprep.subr.mxu0 0.0
    %166 = vmatpush1.msra.mxu0 %v157
    %167 = vmatprep.subr.mxu0 0.0
    %168 = vmatpush1.msra.mxu0 %v158
    %169 = vmatprep.subr.mxu0 0.0
    %170 = vmatpush1.msra.mxu0 %v159
    %171 = vmatprep.subr.mxu0 0.0
    %172 = vmatpush1.msra.mxu0 %v160
    %173 = vmatprep.subr.mxu0 0.0
    %174 = vmatpush1.msra.mxu0 0.0
    %175 = vmatprep.subr.mxu0 0.0
    %176 = vmatpush1.msra.mxu0 0.0
    %177 = vmatprep.subr.mxu0 0.0
    %178 = vmatpush1.msra.mxu0 0.0
    %179 = vmatprep.subr.mxu0 0.0
    %180 = vmatpush1.msra.mxu0 0.0
    %181 = vmatprep.subr.mxu0 0.0
    %182 = vmatpush1.msra.mxu0 0.0
    %183 = vmatprep.subr.mxu0 0.0
    %184 = vmatpush1.msra.mxu0 0.0
    %185 = vmatprep.subr.mxu0 0.0
    %186 = vmatpush1.msra.mxu0 0.0
    %187 = vmatprep.subr.mxu0 0.0
    %188 = vmatpush1.msra.mxu0 0.0
    %189 = vmatprep.subr.mxu0 0.0
    %190 = vmatpush1.msra.mxu0 0.0
    %191 = vmatprep.subr.mxu0 0.0
    %192 = vmatpush1.msra.mxu0 0.0
    %193 = vmatprep.subr.mxu0 0.0
    %194 = vmatpush1.msra.mxu0 0.0
    %195 = vmatprep.subr.mxu0 0.0
    %196 = vmatpush1.msra.mxu0 0.0
    %197 = vmatprep.subr.mxu0 0.0
    %198 = vmatpush1.msra.mxu0 0.0
    %199 = vmatprep.subr.mxu0 0.0
    %200 = vmatpush1.msra.mxu0 0.0
    %201 = vmatprep.subr.mxu0 0.0
    %202 = vmatpush1.msra.mxu0 0.0
    %203 = vmatprep.subr.mxu0 0.0
    %204 = vmatpush1.msra.mxu0 0.0
    %205 = vmatprep.subr.mxu0 0.0
    %206 = vmatpush1.msra.mxu0 0.0
    %207 = vmatprep.subr.mxu0 0.0
    %208 = vmatpush1.msra.mxu0 0.0
    %209 = vmatprep.subr.mxu0 0.0
    %210 = vmatpush1.msra.mxu0 0.0
    %211 = vmatprep.subr.mxu0 0.0
    %212 = vmatpush1.msra.mxu0 0.0
    %213 = vmatprep.subr.mxu0 0.0
    %214 = vmatpush1.msra.mxu0 0.0
    %215 = vmatprep.subr.mxu0 0.0
    %216 = vmatpush1.msra.mxu0 0.0
    %217 = vmatprep.subr.mxu0 0.0
    %218 = vmatpush1.msra.mxu0 0.0
    %219 = vmatprep.subr.mxu0 0.0
    %220 = vmatpush1.msra.mxu0 0.0
    %221 = vmatprep.subr.mxu0 0.0
    %222 = vmatpush1.msra.mxu0 0.0
    %223 = vmatprep.subr.mxu0 0.0
    %224 = vmatpush1.msra.mxu0 0.0
    %225 = vmatprep.subr.mxu0 0.0
    %226 = vmatpush1.msra.mxu0 0.0
    %227 = vmatprep.subr.mxu0 0.0
    %228 = vmatpush1.msra.mxu0 0.0
    %229 = vmatprep.mubr.f32.mxu0 0.0
    %230 = vmatmul.mubr.f32.gmra.mrb[0].mxu0 %v163
    %v231 = vpop.f32.mrb[0].mxu0
    %v232 = vadd.f32 0.0, %v231
    %v233 = vpop.f32.mrb[0].mxu0
    %234 = vdwg.mxu0
    %v235 = vadd.f32 %v161, %v232
    %v236 = vtanh.pop %v235
    %vm237 = vcmask 257024
    %238 = vst.msk [vmem:[#allocation3] sm:$0xf] %vm237, %v236
    %v239 = vld [vmem:[#allocation2 + $0x4] sm:$0xf]
    %v241 = vsel %vm152, %v236, 0
    %243 = vmatprep.subr.mxu0 0.0
    %244 = vmatpush1.msra.mxu0 %v157
    %245 = vmatprep.subr.mxu0 0.0
    %246 = vmatpush1.msra.mxu0 %v158
    %247 = vmatprep.subr.mxu0 0.0
    %248 = vmatpush1.msra.mxu0 %v159
    %249 = vmatprep.subr.mxu0 0.0
    %250 = vmatpush1.msra.mxu0 %v160
    %251 = vmatprep.subr.mxu0 0.0
    %252 = vmatpush1.msra.mxu0 0.0
    %253 = vmatprep.subr.mxu0 0.0
    %254 = vmatpush1.msra.mxu0 0.0
    %255 = vmatprep.subr.mxu0 0.0
    %256 = vmatpush1.msra.mxu0 0.0
    %257 = vmatprep.subr.mxu0 0.0
    %258 = vmatpush1.msra.mxu0 0.0
    %259 = vmatprep.subr.mxu0 0.0
    %260 = vmatpush1.msra.mxu0 0.0
    %261 = vmatprep.subr.mxu0 0.0
    %262 = vmatpush1.msra.mxu0 0.0
    %263 = vmatprep.subr.mxu0 0.0
    %264 = vmatpush1.msra.mxu0 0.0
    %265 = vmatprep.subr.mxu0 0.0
    %266 = vmatpush1.msra.mxu0 0.0
    %267 = vmatprep.subr.mxu0 0.0
    %268 = vmatpush1.msra.mxu0 0.0
    %269 = vmatprep.subr.mxu0 0.0
    %270 = vmatpush1.msra.mxu0 0.0
    %271 = vmatprep.subr.mxu0 0.0
    %272 = vmatpush1.msra.mxu0 0.0
    %273 = vmatprep.subr.mxu0 0.0
    %274 = vmatpush1.msra.mxu0 0.0
    %275 = vmatprep.subr.mxu0 0.0
    %276 = vmatpush1.msra.mxu0 0.0
    %277 = vmatprep.subr.mxu0 0.0
    %278 = vmatpush1.msra.mxu0 0.0
    %279 = vmatprep.subr.mxu0 0.0
    %280 = vmatpush1.msra.mxu0 0.0
    %281 = vmatprep.subr.mxu0 0.0
    %282 = vmatpush1.msra.mxu0 0.0
    %283 = vmatprep.subr.mxu0 0.0
    %284 = vmatpush1.msra.mxu0 0.0
    %285 = vmatprep.subr.mxu0 0.0
    %286 = vmatpush1.msra.mxu0 0.0
    %287 = vmatprep.subr.mxu0 0.0
    %288 = vmatpush1.msra.mxu0 0.0
    %289 = vmatprep.subr.mxu0 0.0
    %290 = vmatpush1.msra.mxu0 0.0
    %291 = vmatprep.subr.mxu0 0.0
    %292 = vmatpush1.msra.mxu0 0.0
    %293 = vmatprep.subr.mxu0 0.0
    %294 = vmatpush1.msra.mxu0 0.0
    %295 = vmatprep.subr.mxu0 0.0
    %296 = vmatpush1.msra.mxu0 0.0
    %297 = vmatprep.subr.mxu0 0.0
    %298 = vmatpush1.msra.mxu0 0.0
    %299 = vmatprep.subr.mxu0 0.0
    %300 = vmatpush1.msra.mxu0 0.0
    %301 = vmatprep.subr.mxu0 0.0
    %302 = vmatpush1.msra.mxu0 0.0
    %303 = vmatprep.subr.mxu0 0.0
    %304 = vmatpush1.msra.mxu0 0.0
    %305 = vmatprep.subr.mxu0 0.0
    %306 = vmatpush1.msra.mxu0 0.0
    %307 = vmatprep.mubr.f32.mxu0 0.0
    %308 = vmatmul.mubr.f32.gmra.mrb[0].mxu0 %v241
    %v309 = vpop.f32.mrb[0].mxu0
    %v310 = vadd.f32 0.0, %v309
    %v311 = vpop.f32.mrb[0].mxu0
    %312 = vdwg.mxu0
    %v313 = vadd.f32 %v239, %v310
    %v314 = vtanh.pop %v313
    %315 = vst.msk [vmem:[#allocation3 + $0x4] sm:$0xf] %vm237, %v314
    %v316 = vld [vmem:[#allocation2 + $0x8] sm:$0xf]
    %v318 = vsel %vm152, %v314, 0
    %320 = vmatprep.subr.mxu0 0.0
    %321 = vmatpush1.msra.mxu0 %v157
    %322 = vmatprep.subr.mxu0 0.0
    %323 = vmatpush1.msra.mxu0 %v158
    %324 = vmatprep.subr.mxu0 0.0
    %325 = vmatpush1.msra.mxu0 %v159
    %326 = vmatprep.subr.mxu0 0.0
    %327 = vmatpush1.msra.mxu0 %v160
    %328 = vmatprep.subr.mxu0 0.0
    %329 = vmatpush1.msra.mxu0 0.0
    %330 = vmatprep.subr.mxu0 0.0
    %331 = vmatpush1.msra.mxu0 0.0
    %332 = vmatprep.subr.mxu0 0.0
    %333 = vmatpush1.msra.mxu0 0.0
    %334 = vmatprep.subr.mxu0 0.0
    %335 = vmatpush1.msra.mxu0 0.0
    %336 = vmatprep.subr.mxu0 0.0
    %337 = vmatpush1.msra.mxu0 0.0
    %338 = vmatprep.subr.mxu0 0.0
    %339 = vmatpush1.msra.mxu0 0.0
    %340 = vmatprep.subr.mxu0 0.0
    %341 = vmatpush1.msra.mxu0 0.0
    %342 = vmatprep.subr.mxu0 0.0
    %343 = vmatpush1.msra.mxu0 0.0
    %344 = vmatprep.subr.mxu0 0.0
    %345 = vmatpush1.msra.mxu0 0.0
    %346 = vmatprep.subr.mxu0 0.0
    %347 = vmatpush1.msra.mxu0 0.0
    %348 = vmatprep.subr.mxu0 0.0
    %349 = vmatpush1.msra.mxu0 0.0
    %350 = vmatprep.subr.mxu0 0.0
    %351 = vmatpush1.msra.mxu0 0.0
    %352 = vmatprep.subr.mxu0 0.0
    %353 = vmatpush1.msra.mxu0 0.0
    %354 = vmatprep.subr.mxu0 0.0
    %355 = vmatpush1.msra.mxu0 0.0
    %356 = vmatprep.subr.mxu0 0.0
    %357 = vmatpush1.msra.mxu0 0.0
    %358 = vmatprep.subr.mxu0 0.0
    %359 = vmatpush1.msra.mxu0 0.0
    %360 = vmatprep.subr.mxu0 0.0
    %361 = vmatpush1.msra.mxu0 0.0
    %362 = vmatprep.subr.mxu0 0.0
    %363 = vmatpush1.msra.mxu0 0.0
    %364 = vmatprep.subr.mxu0 0.0
    %365 = vmatpush1.msra.mxu0 0.0
    %366 = vmatprep.subr.mxu0 0.0
    %367 = vmatpush1.msra.mxu0 0.0
    %368 = vmatprep.subr.mxu0 0.0
    %369 = vmatpush1.msra.mxu0 0.0
    %370 = vmatprep.subr.mxu0 0.0
    %371 = vmatpush1.msra.mxu0 0.0
    %372 = vmatprep.subr.mxu0 0.0
    %373 = vmatpush1.msra.mxu0 0.0
    %374 = vmatprep.subr.mxu0 0.0
    %375 = vmatpush1.msra.mxu0 0.0
    %376 = vmatprep.subr.mxu0 0.0
    %377 = vmatpush1.msra.mxu0 0.0
    %378 = vmatprep.subr.mxu0 0.0
    %379 = vmatpush1.msra.mxu0 0.0
    %380 = vmatprep.subr.mxu0 0.0
    %381 = vmatpush1.msra.mxu0 0.0
    %382 = vmatprep.subr.mxu0 0.0
    %383 = vmatpush1.msra.mxu0 0.0
    %384 = vmatprep.mubr.f32.mxu0 0.0
    %385 = vmatmul.mubr.f32.gmra.mrb[0].mxu0 %v318
    %v386 = vpop.f32.mrb[0].mxu0
    %v387 = vadd.f32 0.0, %v386
    %v388 = vpop.f32.mrb[0].mxu0
    %389 = vdwg.mxu0
    %v390 = vadd.f32 %v316, %v387
    %v391 = vtanh.pop %v390
    %392 = vst.msk [vmem:[#allocation3 + $0x8] sm:$0xf] %vm237, %v391
    %v393 = vld [vmem:[#allocation2 + $0xc] sm:$0xf]
    %v395 = vsel %vm152, %v391, 0
    %397 = vmatprep.subr.mxu0 0.0
    %398 = vmatpush1.msra.mxu0 %v157
    %399 = vmatprep.subr.mxu0 0.0
    %400 = vmatpush1.msra.mxu0 %v158
    %401 = vmatprep.subr.mxu0 0.0
    %402 = vmatpush1.msra.mxu0 %v159
    %403 = vmatprep.subr.mxu0 0.0
    %404 = vmatpush1.msra.mxu0 %v160
    %405 = vmatprep.subr.mxu0 0.0
    %406 = vmatpush1.msra.mxu0 0.0
    %407 = vmatprep.subr.mxu0 0.0
    %408 = vmatpush1.msra.mxu0 0.0
    %409 = vmatprep.subr.mxu0 0.0
    %410 = vmatpush1.msra.mxu0 0.0
    %411 = vmatprep.subr.mxu0 0.0
    %412 = vmatpush1.msra.mxu0 0.0
    %413 = vmatprep.subr.mxu0 0.0
    %414 = vmatpush1.msra.mxu0 0.0
    %415 = vmatprep.subr.mxu0 0.0
    %416 = vmatpush1.msra.mxu0 0.0
    %417 = vmatprep.subr.mxu0 0.0
    %418 = vmatpush1.msra.mxu0 0.0
    %419 = vmatprep.subr.mxu0 0.0
    %420 = vmatpush1.msra.mxu0 0.0
    %421 = vmatprep.subr.mxu0 0.0
    %422 = vmatpush1.msra.mxu0 0.0
    %423 = vmatprep.subr.mxu0 0.0
    %424 = vmatpush1.msra.mxu0 0.0
    %425 = vmatprep.subr.mxu0 0.0
    %426 = vmatpush1.msra.mxu0 0.0
    %427 = vmatprep.subr.mxu0 0.0
    %428 = vmatpush1.msra.mxu0 0.0
    %429 = vmatprep.subr.mxu0 0.0
    %430 = vmatpush1.msra.mxu0 0.0
    %431 = vmatprep.subr.mxu0 0.0
    %432 = vmatpush1.msra.mxu0 0.0
    %433 = vmatprep.subr.mxu0 0.0
    %434 = vmatpush1.msra.mxu0 0.0
    %435 = vmatprep.subr.mxu0 0.0
    %436 = vmatpush1.msra.mxu0 0.0
    %437 = vmatprep.subr.mxu0 0.0
    %438 = vmatpush1.msra.mxu0 0.0
    %439 = vmatprep.subr.mxu0 0.0
    %440 = vmatpush1.msra.mxu0 0.0
    %441 = vmatprep.subr.mxu0 0.0
    %442 = vmatpush1.msra.mxu0 0.0
    %443 = vmatprep.subr.mxu0 0.0
    %444 = vmatpush1.msra.mxu0 0.0
    %445 = vmatprep.subr.mxu0 0.0
    %446 = vmatpush1.msra.mxu0 0.0
    %447 = vmatprep.subr.mxu0 0.0
    %448 = vmatpush1.msra.mxu0 0.0
    %449 = vmatprep.subr.mxu0 0.0
    %450 = vmatpush1.msra.mxu0 0.0
    %451 = vmatprep.subr.mxu0 0.0
    %452 = vmatpush1.msra.mxu0 0.0
    %453 = vmatprep.subr.mxu0 0.0
    %454 = vmatpush1.msra.mxu0 0.0
    %455 = vmatprep.subr.mxu0 0.0
    %456 = vmatpush1.msra.mxu0 0.0
    %457 = vmatprep.subr.mxu0 0.0
    %458 = vmatpush1.msra.mxu0 0.0
    %459 = vmatprep.subr.mxu0 0.0
    %460 = vmatpush1.msra.mxu0 0.0
    %461 = vmatprep.mubr.f32.mxu0 0.0
    %462 = vmatmul.mubr.f32.gmra.mrb[0].mxu0 %v395
    %v463 = vpop.f32.mrb[0].mxu0
    %v464 = vadd.f32 0.0, %v463
    %v465 = vpop.f32.mrb[0].mxu0
    %466 = vdwg.mxu0
    %v467 = vadd.f32 %v393, %v464
    %v468 = vtanh.pop %v467
    %469 = vst.msk [vmem:[#allocation3 + $0xc] sm:$0xf] %vm237, %v468
    %v470 = vld [vmem:[#allocation2 + $0x10] sm:$0xf]
    %v472 = vsel %vm152, %v468, 0
    %474 = vmatprep.subr.mxu0 0.0
    %475 = vmatpush1.msra.mxu0 %v157
    %476 = vmatprep.subr.mxu0 0.0
    %477 = vmatpush1.msra.mxu0 %v158
    %478 = vmatprep.subr.mxu0 0.0
    %479 = vmatpush1.msra.mxu0 %v159
    %480 = vmatprep.subr.mxu0 0.0
    %481 = vmatpush1.msra.mxu0 %v160
    %482 = vmatprep.subr.mxu0 0.0
    %483 = vmatpush1.msra.mxu0 0.0
    %484 = vmatprep.subr.mxu0 0.0
    %485 = vmatpush1.msra.mxu0 0.0
    %486 = vmatprep.subr.mxu0 0.0
    %487 = vmatpush1.msra.mxu0 0.0
    %488 = vmatprep.subr.mxu0 0.0
    %489 = vmatpush1.msra.mxu0 0.0
    %490 = vmatprep.subr.mxu0 0.0
    %491 = vmatpush1.msra.mxu0 0.0
    %492 = vmatprep.subr.mxu0 0.0
    %493 = vmatpush1.msra.mxu0 0.0
    %494 = vmatprep.subr.mxu0 0.0
    %495 = vmatpush1.msra.mxu0 0.0
    %496 = vmatprep.subr.mxu0 0.0
    %497 = vmatpush1.msra.mxu0 0.0
    %498 = vmatprep.subr.mxu0 0.0
    %499 = vmatpush1.msra.mxu0 0.0
    %500 = vmatprep.subr.mxu0 0.0
    %501 = vmatpush1.msra.mxu0 0.0
    %502 = vmatprep.subr.mxu0 0.0
    %503 = vmatpush1.msra.mxu0 0.0
    %504 = vmatprep.subr.mxu0 0.0
    %505 = vmatpush1.msra.mxu0 0.0
    %506 = vmatprep.subr.mxu0 0.0
    %507 = vmatpush1.msra.mxu0 0.0
    %508 = vmatprep.subr.mxu0 0.0
    %509 = vmatpush1.msra.mxu0 0.0
    %510 = vmatprep.subr.mxu0 0.0
    %511 = vmatpush1.msra.mxu0 0.0
    %512 = vmatprep.subr.mxu0 0.0
    %513 = vmatpush1.msra.mxu0 0.0
    %514 = vmatprep.subr.mxu0 0.0
    %515 = vmatpush1.msra.mxu0 0.0
    %516 = vmatprep.subr.mxu0 0.0
    %517 = vmatpush1.msra.mxu0 0.0
    %518 = vmatprep.subr.mxu0 0.0
    %519 = vmatpush1.msra.mxu0 0.0
    %520 = vmatprep.subr.mxu0 0.0
    %521 = vmatpush1.msra.mxu0 0.0
    %522 = vmatprep.subr.mxu0 0.0
    %523 = vmatpush1.msra.mxu0 0.0
    %524 = vmatprep.subr.mxu0 0.0
    %525 = vmatpush1.msra.mxu0 0.0
    %526 = vmatprep.subr.mxu0 0.0
    %527 = vmatpush1.msra.mxu0 0.0
    %528 = vmatprep.subr.mxu0 0.0
    %529 = vmatpush1.msra.mxu0 0.0
    %530 = vmatprep.subr.mxu0 0.0
    %531 = vmatpush1.msra.mxu0 0.0
    %532 = vmatprep.subr.mxu0 0.0
    %533 = vmatpush1.msra.mxu0 0.0
    %534 = vmatprep.subr.mxu0 0.0
    %535 = vmatpush1.msra.mxu0 0.0
    %536 = vmatprep.subr.mxu0 0.0
    %537 = vmatpush1.msra.mxu0 0.0
    %538 = vmatprep.mubr.f32.mxu0 0.0
    %539 = vmatmul.mubr.f32.gmra.mrb[0].mxu0 %v472
    %v540 = vpop.f32.mrb[0].mxu0
    %v541 = vadd.f32 0.0, %v540
    %v542 = vpop.f32.mrb[0].mxu0
    %543 = vdwg.mxu0
    %v544 = vadd.f32 %v470, %v541
    %v545 = vtanh.pop %v544
    %546 = vst.msk [vmem:[#allocation3 + $0x10] sm:$0xf] %vm237, %v545
    %v547 = vld [vmem:[#allocation2 + $0x14] sm:$0xf]
    %v549 = vsel %vm152, %v545, 0
    %551 = vmatprep.subr.mxu0 0.0
    %552 = vmatpush1.msra.mxu0 %v157
    %553 = vmatprep.subr.mxu0 0.0
    %554 = vmatpush1.msra.mxu0 %v158
    %555 = vmatprep.subr.mxu0 0.0
    %556 = vmatpush1.msra.mxu0 %v159
    %557 = vmatprep.subr.mxu0 0.0
    %558 = vmatpush1.msra.mxu0 %v160
    %559 = vmatprep.subr.mxu0 0.0
    %560 = vmatpush1.msra.mxu0 0.0
    %561 = vmatprep.subr.mxu0 0.0
    %562 = vmatpush1.msra.mxu0 0.0
    %563 = vmatprep.subr.mxu0 0.0
    %564 = vmatpush1.msra.mxu0 0.0
    %565 = vmatprep.subr.mxu0 0.0
    %566 = vmatpush1.msra.mxu0 0.0
    %567 = vmatprep.subr.mxu0 0.0
    %568 = vmatpush1.msra.mxu0 0.0
    %569 = vmatprep.subr.mxu0 0.0
    %570 = vmatpush1.msra.mxu0 0.0
    %571 = vmatprep.subr.mxu0 0.0
    %572 = vmatpush1.msra.mxu0 0.0
    %573 = vmatprep.subr.mxu0 0.0
    %574 = vmatpush1.msra.mxu0 0.0
    %575 = vmatprep.subr.mxu0 0.0
    %576 = vmatpush1.msra.mxu0 0.0
    %577 = vmatprep.subr.mxu0 0.0
    %578 = vmatpush1.msra.mxu0 0.0
    %579 = vmatprep.subr.mxu0 0.0
    %580 = vmatpush1.msra.mxu0 0.0
    %581 = vmatprep.subr.mxu0 0.0
    %582 = vmatpush1.msra.mxu0 0.0
    %583 = vmatprep.subr.mxu0 0.0
    %584 = vmatpush1.msra.mxu0 0.0
    %585 = vmatprep.subr.mxu0 0.0
    %586 = vmatpush1.msra.mxu0 0.0
    %587 = vmatprep.subr.mxu0 0.0
    %588 = vmatpush1.msra.mxu0 0.0
    %589 = vmatprep.subr.mxu0 0.0
    %590 = vmatpush1.msra.mxu0 0.0
    %591 = vmatprep.subr.mxu0 0.0
    %592 = vmatpush1.msra.mxu0 0.0
    %593 = vmatprep.subr.mxu0 0.0
    %594 = vmatpush1.msra.mxu0 0.0
    %595 = vmatprep.subr.mxu0 0.0
    %596 = vmatpush1.msra.mxu0 0.0
    %597 = vmatprep.subr.mxu0 0.0
    %598 = vmatpush1.msra.mxu0 0.0
    %599 = vmatprep.subr.mxu0 0.0
    %600 = vmatpush1.msra.mxu0 0.0
    %601 = vmatprep.subr.mxu0 0.0
    %602 = vmatpush1.msra.mxu0 0.0
    %603 = vmatprep.subr.mxu0 0.0
    %604 = vmatpush1.msra.mxu0 0.0
    %605 = vmatprep.subr.mxu0 0.0
    %606 = vmatpush1.msra.mxu0 0.0
    %607 = vmatprep.subr.mxu0 0.0
    %608 = vmatpush1.msra.mxu0 0.0
    %609 = vmatprep.subr.mxu0 0.0
    %610 = vmatpush1.msra.mxu0 0.0
    %611 = vmatprep.subr.mxu0 0.0
    %612 = vmatpush1.msra.mxu0 0.0
    %613 = vmatprep.subr.mxu0 0.0
    %614 = vmatpush1.msra.mxu0 0.0
    %615 = vmatprep.mubr.f32.mxu0 0.0
    %616 = vmatmul.mubr.f32.gmra.mrb[0].mxu0 %v549
    %v617 = vpop.f32.mrb[0].mxu0
    %v618 = vadd.f32 0.0, %v617
    %v619 = vpop.f32.mrb[0].mxu0
    %620 = vdwg.mxu0
    %v621 = vadd.f32 %v547, %v618
    %v622 = vtanh.pop %v621
    %623 = vst.msk [vmem:[#allocation3 + $0x14] sm:$0xf] %vm237, %v622
    %v624 = vld [vmem:[#allocation2 + $0x18] sm:$0xf]
    %v626 = vsel %vm152, %v622, 0
    %628 = vmatprep.subr.mxu0 0.0
    %629 = vmatpush1.msra.mxu0 %v157
    %630 = vmatprep.subr.mxu0 0.0
    %631 = vmatpush1.msra.mxu0 %v158
    %632 = vmatprep.subr.mxu0 0.0
    %633 = vmatpush1.msra.mxu0 %v159
    %634 = vmatprep.subr.mxu0 0.0
    %635 = vmatpush1.msra.mxu0 %v160
    %636 = vmatprep.subr.mxu0 0.0
    %637 = vmatpush1.msra.mxu0 0.0
    %638 = vmatprep.subr.mxu0 0.0
    %639 = vmatpush1.msra.mxu0 0.0
    %640 = vmatprep.subr.mxu0 0.0
    %641 = vmatpush1.msra.mxu0 0.0
    %642 = vmatprep.subr.mxu0 0.0
    %643 = vmatpush1.msra.mxu0 0.0
    %644 = vmatprep.subr.mxu0 0.0
    %645 = vmatpush1.msra.mxu0 0.0
    %646 = vmatprep.subr.mxu0 0.0
    %647 = vmatpush1.msra.mxu0 0.0
    %648 = vmatprep.subr.mxu0 0.0
    %649 = vmatpush1.msra.mxu0 0.0
    %650 = vmatprep.subr.mxu0 0.0
    %651 = vmatpush1.msra.mxu0 0.0
    %652 = vmatprep.subr.mxu0 0.0
    %653 = vmatpush1.msra.mxu0 0.0
    %654 = vmatprep.subr.mxu0 0.0
    %655 = vmatpush1.msra.mxu0 0.0
    %656 = vmatprep.subr.mxu0 0.0
    %657 = vmatpush1.msra.mxu0 0.0
    %658 = vmatprep.subr.mxu0 0.0
    %659 = vmatpush1.msra.mxu0 0.0
    %660 = vmatprep.subr.mxu0 0.0
    %661 = vmatpush1.msra.mxu0 0.0
    %662 = vmatprep.subr.mxu0 0.0
    %663 = vmatpush1.msra.mxu0 0.0
    %664 = vmatprep.subr.mxu0 0.0
    %665 = vmatpush1.msra.mxu0 0.0
    %666 = vmatprep.subr.mxu0 0.0
    %667 = vmatpush1.msra.mxu0 0.0
    %668 = vmatprep.subr.mxu0 0.0
    %669 = vmatpush1.msra.mxu0 0.0
    %670 = vmatprep.subr.mxu0 0.0
    %671 = vmatpush1.msra.mxu0 0.0
    %672 = vmatprep.subr.mxu0 0.0
    %673 = vmatpush1.msra.mxu0 0.0
    %674 = vmatprep.subr.mxu0 0.0
    %675 = vmatpush1.msra.mxu0 0.0
    %676 = vmatprep.subr.mxu0 0.0
    %677 = vmatpush1.msra.mxu0 0.0
    %678 = vmatprep.subr.mxu0 0.0
    %679 = vmatpush1.msra.mxu0 0.0
    %680 = vmatprep.subr.mxu0 0.0
    %681 = vmatpush1.msra.mxu0 0.0
    %682 = vmatprep.subr.mxu0 0.0
    %683 = vmatpush1.msra.mxu0 0.0
    %684 = vmatprep.subr.mxu0 0.0
    %685 = vmatpush1.msra.mxu0 0.0
    %686 = vmatprep.subr.mxu0 0.0
    %687 = vmatpush1.msra.mxu0 0.0
    %688 = vmatprep.subr.mxu0 0.0
    %689 = vmatpush1.msra.mxu0 0.0
    %690 = vmatprep.subr.mxu0 0.0
    %691 = vmatpush1.msra.mxu0 0.0
    %692 = vmatprep.mubr.f32.mxu0 0.0
    %693 = vmatmul.mubr.f32.gmra.mrb[0].mxu0 %v626
    %v694 = vpop.f32.mrb[0].mxu0
    %v695 = vadd.f32 0.0, %v694
    %v696 = vpop.f32.mrb[0].mxu0
    %697 = vdwg.mxu0
    %v698 = vadd.f32 %v624, %v695
    %v699 = vtanh.pop %v698
    %700 = vst.msk [vmem:[#allocation3 + $0x18] sm:$0xf] %vm237, %v699
    %v701 = vld [vmem:[#allocation2 + $0x1c] sm:$0xf]
    %v703 = vsel %vm152, %v699, 0
    %705 = vmatprep.subr.mxu0 0.0
    %706 = vmatpush1.msra.mxu0 %v157
    %707 = vmatprep.subr.mxu0 0.0
    %708 = vmatpush1.msra.mxu0 %v158
    %709 = vmatprep.subr.mxu0 0.0
    %710 = vmatpush1.msra.mxu0 %v159
    %711 = vmatprep.subr.mxu0 0.0
    %712 = vmatpush1.msra.mxu0 %v160
    %713 = vmatprep.subr.mxu0 0.0
    %714 = vmatpush1.msra.mxu0 0.0
    %715 = vmatprep.subr.mxu0 0.0
    %716 = vmatpush1.msra.mxu0 0.0
    %717 = vmatprep.subr.mxu0 0.0
    %718 = vmatpush1.msra.mxu0 0.0
    %719 = vmatprep.subr.mxu0 0.0
    %720 = vmatpush1.msra.mxu0 0.0
    %721 = vmatprep.subr.mxu0 0.0
    %722 = vmatpush1.msra.mxu0 0.0
    %723 = vmatprep.subr.mxu0 0.0
    %724 = vmatpush1.msra.mxu0 0.0
    %725 = vmatprep.subr.mxu0 0.0
    %726 = vmatpush1.msra.mxu0 0.0
    %727 = vmatprep.subr.mxu0 0.0
    %728 = vmatpush1.msra.mxu0 0.0
    %729 = vmatprep.subr.mxu0 0.0
    %730 = vmatpush1.msra.mxu0 0.0
    %731 = vmatprep.subr.mxu0 0.0
    %732 = vmatpush1.msra.mxu0 0.0
    %733 = vmatprep.subr.mxu0 0.0
    %734 = vmatpush1.msra.mxu0 0.0
    %735 = vmatprep.subr.mxu0 0.0
    %736 = vmatpush1.msra.mxu0 0.0
    %737 = vmatprep.subr.mxu0 0.0
    %738 = vmatpush1.msra.mxu0 0.0
    %739 = vmatprep.subr.mxu0 0.0
    %740 = vmatpush1.msra.mxu0 0.0
    %741 = vmatprep.subr.mxu0 0.0
    %742 = vmatpush1.msra.mxu0 0.0
    %743 = vmatprep.subr.mxu0 0.0
    %744 = vmatpush1.msra.mxu0 0.0
    %745 = vmatprep.subr.mxu0 0.0
    %746 = vmatpush1.msra.mxu0 0.0
    %747 = vmatprep.subr.mxu0 0.0
    %748 = vmatpush1.msra.mxu0 0.0
    %749 = vmatprep.subr.mxu0 0.0
    %750 = vmatpush1.msra.mxu0 0.0
    %751 = vmatprep.subr.mxu0 0.0
    %752 = vmatpush1.msra.mxu0 0.0
    %753 = vmatprep.subr.mxu0 0.0
    %754 = vmatpush1.msra.mxu0 0.0
    %755 = vmatprep.subr.mxu0 0.0
    %756 = vmatpush1.msra.mxu0 0.0
    %757 = vmatprep.subr.mxu0 0.0
    %758 = vmatpush1.msra.mxu0 0.0
    %759 = vmatprep.subr.mxu0 0.0
    %760 = vmatpush1.msra.mxu0 0.0
    %761 = vmatprep.subr.mxu0 0.0
    %762 = vmatpush1.msra.mxu0 0.0
    %763 = vmatprep.subr.mxu0 0.0
    %764 = vmatpush1.msra.mxu0 0.0
    %765 = vmatprep.subr.mxu0 0.0
    %766 = vmatpush1.msra.mxu0 0.0
    %767 = vmatprep.subr.mxu0 0.0
    %768 = vmatpush1.msra.mxu0 0.0
    %769 = vmatprep.mubr.f32.mxu0 0.0
    %770 = vmatmul.mubr.f32.gmra.mrb[0].mxu0 %v703
    %v771 = vpop.f32.mrb[0].mxu0
    %v772 = vadd.f32 0.0, %v771
    %v773 = vpop.f32.mrb[0].mxu0
    %774 = vdwg.mxu0
    %v775 = vadd.f32 %v701, %v772
    %v776 = vtanh.pop %v775
    %777 = vst.msk [vmem:[#allocation3 + $0x1c] sm:$0xf] %vm237, %v776
    %v778 = vld [vmem:[#allocation3] sm:$0xff]
    %v779 = vld [vmem:[#allocation3 + $0x8] sm:$0xff]
    %v780 = vld [vmem:[#allocation3 + $0x10] sm:$0xff]
    %v781 = vld [vmem:[#allocation3 + $0x18] sm:$0xff]
    %v782 = vld [vmem:[#allocation4] sm:$0xff]
    %v783 = vld [vmem:[#allocation4 + $0x8] sm:$0xff]
    %v784 = vld [vmem:[#allocation4 + $0x10] sm:$0xff]
    %v785 = vld [vmem:[#allocation4 + $0x18] sm:$0xff]
    %v786 = vld [vmem:[%s5] sm:$0x1]
    %v788 = vlaneseq
    %v789 = vshrl.u32 %v788, 7
    %v790 = vsub.s32 0, %v789
    %v791 = vrot.slane %v786, %v790
    %v794 = vsel %vm152, %v778, 0
    %v797 = vsel %vm152, %v779, 0
    %v800 = vsel %vm152, %v780, 0
    %v803 = vsel %vm152, %v781, 0
    %805 = vmatprep.subr.mxu0 0.0
    %806 = vmatpush1.msra.mxu0 %v782
    %807 = vmatprep.subr.mxu0 0.0
    %808 = vmatpush1.msra.mxu0 %v783
    %809 = vmatprep.subr.mxu0 0.0
    %810 = vmatpush1.msra.mxu0 %v784
    %811 = vmatprep.subr.mxu0 0.0
    %812 = vmatpush1.msra.mxu0 %v785
    %813 = vmatprep.subr.mxu0 0.0
    %814 = vmatpush1.msra.mxu0 0.0
    %815 = vmatprep.subr.mxu0 0.0
    %816 = vmatpush1.msra.mxu0 0.0
    %817 = vmatprep.subr.mxu0 0.0
    %818 = vmatpush1.msra.mxu0 0.0
    %819 = vmatprep.subr.mxu0 0.0
    %820 = vmatpush1.msra.mxu0 0.0
    %821 = vmatprep.subr.mxu0 0.0
    %822 = vmatpush1.msra.mxu0 0.0
    %823 = vmatprep.subr.mxu0 0.0
    %824 = vmatpush1.msra.mxu0 0.0
    %825 = vmatprep.subr.mxu0 0.0
    %826 = vmatpush1.msra.mxu0 0.0
    %827 = vmatprep.subr.mxu0 0.0
    %828 = vmatpush1.msra.mxu0 0.0
    %829 = vmatprep.subr.mxu0 0.0
    %830 = vmatpush1.msra.mxu0 0.0
    %831 = vmatprep.subr.mxu0 0.0
    %832 = vmatpush1.msra.mxu0 0.0
    %833 = vmatprep.subr.mxu0 0.0
    %834 = vmatpush1.msra.mxu0 0.0
    %835 = vmatprep.subr.mxu0 0.0
    %836 = vmatpush1.msra.mxu0 0.0
    %837 = vmatprep.subr.mxu0 0.0
    %838 = vmatpush1.msra.mxu0 0.0
    %839 = vmatprep.subr.mxu0 0.0
    %840 = vmatpush1.msra.mxu0 0.0
    %841 = vmatprep.subr.mxu0 0.0
    %842 = vmatpush1.msra.mxu0 0.0
    %843 = vmatprep.subr.mxu0 0.0
    %844 = vmatpush1.msra.mxu0 0.0
    %845 = vmatprep.subr.mxu0 0.0
    %846 = vmatpush1.msra.mxu0 0.0
    %847 = vmatprep.subr.mxu0 0.0
    %848 = vmatpush1.msra.mxu0 0.0
    %849 = vmatprep.subr.mxu0 0.0
    %850 = vmatpush1.msra.mxu0 0.0
    %851 = vmatprep.subr.mxu0 0.0
    %852 = vmatpush1.msra.mxu0 0.0
    %853 = vmatprep.subr.mxu0 0.0
    %854 = vmatpush1.msra.mxu0 0.0
    %855 = vmatprep.subr.mxu0 0.0
    %856 = vmatpush1.msra.mxu0 0.0
    %857 = vmatprep.subr.mxu0 0.0
    %858 = vmatpush1.msra.mxu0 0.0
    %859 = vmatprep.subr.mxu0 0.0
    %860 = vmatpush1.msra.mxu0 0.0
    %861 = vmatprep.subr.mxu0 0.0
    %862 = vmatpush1.msra.mxu0 0.0
    %863 = vmatprep.subr.mxu0 0.0
    %864 = vmatpush1.msra.mxu0 0.0
    %865 = vmatprep.subr.mxu0 0.0
    %866 = vmatpush1.msra.mxu0 0.0
    %867 = vmatprep.subr.mxu0 0.0
    %868 = vmatpush1.msra.mxu0 0.0
    %869 = vmatprep.mubr.f32.mxu0 0.0
    %870 = vmatmul.mubr.f32.gmra.mrb[0].mxu0 %v794
    %v871 = vpop.f32.mrb[0].mxu0
    %v872 = vadd.f32 %v791, %v871
    %v873 = vpop.f32.mrb[0].mxu0
    %874 = vmatprep.mubr.f32.mxu0 0.0
    %875 = vmatmul.mubr.f32.gmra.mrb[0].mxu0 %v797
    %v876 = vpop.f32.mrb[0].mxu0
    %v877 = vadd.f32 %v791, %v876
    %v878 = vpop.f32.mrb[0].mxu0
    %879 = vmatprep.mubr.f32.mxu0 0.0
    %880 = vmatmul.mubr.f32.gmra.mrb[0].mxu0 %v800
    %v881 = vpop.f32.mrb[0].mxu0
    %v882 = vadd.f32 %v791, %v881
    %v883 = vpop.f32.mrb[0].mxu0
    %884 = vmatprep.mubr.f32.mxu0 0.0
    %885 = vmatmul.mubr.f32.gmra.mrb[0].mxu0 %v803
    %v886 = vpop.f32.mrb[0].mxu0
    %v887 = vadd.f32 %v791, %v886
    %v888 = vpop.f32.mrb[0].mxu0
    %889 = vdwg.mxu0
    %890 = vst [vmem:[#allocation7] sm:$0xff] %v872
    %891 = vst [vmem:[#allocation7 + $0x8] sm:$0xff] %v877
    %892 = vst [vmem:[#allocation7 + $0x10] sm:$0xff] %v882
    %893 = vst [vmem:[#allocation7 + $0x18] sm:$0xff] %v887
    // Predicated region
    $region30: #{tpu_custom_call.1} parent=1 // pred_check
      _
    $region31: #{tpu_custom_call.1} parent=1 // pred_check_branch
      %895 = sbr.rel (0) target = $region33
    $region32: #{tpu_custom_call.1} parent=1 // pred_region
      %s897 = ssub.s32 512, 512
      %898 = vsyncadd [#allocation6], %s897
      %s899 = sshll.u32 [#allocation7], 4
      %s900 = int_to_ptr.vmem [resolvable:$true] %s899
      %905 = dma.vmem_to_hbm [thread:$0]  %s900, 512, %s6, [#allocation6], 128, 128, 8
    $region33: #{tpu_custom_call.1} parent=1 // pred_fallthru
      _
    // Predicated region
    $region34: #{tpu_custom_call.1} parent=1 // pred_check
      _
    $region35: #{tpu_custom_call.1} parent=1 // pred_check_branch
      %907 = sbr.rel (0) target = $region37
    $region36: #{tpu_custom_call.1} parent=1 // pred_region
      %908 = dma.done [#allocation6], 512
    $region37: #{tpu_custom_call.1} parent=1 // pred_fallthru
      _
    %909 = vsyncpa [#allocation5], 1
    %910 = vsyncpa [#allocation6], 1

</llo_original>
